<compile_context>
chip_gen: v7x
topology: tpu7x:2x2x1
jax: 0.10.0
libtpu: 0.0.40
codegen_flags: <defaults>
</compile_context>

<pallas_src>
import jax
import jax.numpy as jnp
from jax.experimental import pallas as pl
from jax.experimental.pallas import tpu as pltpu


def _identity_kernel(x_ref, o_ref):
    # Pure pass-through of the current VMEM tile.
    o_ref[...] = x_ref[...]


def _lane_dense_view(n: int) -> tuple[int, int]:
    """Pick (rows, cols) with cols a large multiple of 128 that exactly divides n."""
    for cw in (4096, 2048, 1024, 512, 256, 128):
        if n % cw == 0:
            return n // cw, cw
    return 1, n  # tiny / odd sizes: single row (masked stores acceptable at these sizes)


def _choose_tiles(R: int, C: int, itemsize: int,
                  target_block_bytes: int, min_steps: int = 8) -> tuple[int, int]:
    """Pick (tr, tc) block dims: lane-dense, sublane-aligned, with enough grid steps to pipeline."""
    # Sublane packing multiple per dtype: f32 -> 8, bf16 -> 16, int8/fp8 -> 32.
    sublane = max(8, 32 // max(1, itemsize))

    row_bytes = C * itemsize
    if row_bytes <= target_block_bytes:
        tc = C  # block spans the full lane-dense width (common case)
    else:
        tc = max(128, ((target_block_bytes // itemsize) // 128) * 128)

    rows_per_block = max(1, target_block_bytes // (tc * itemsize))
    if rows_per_block >= R:
        tr = R  # full row extent is always a legal block dim
    else:
        tr = max(sublane, (rows_per_block // sublane) * sublane)

    # Guarantee enough grid steps for the pipeline to overlap fetch / copy / writeback.
    total_bytes = R * C * itemsize
    if tc == C and total_bytes > 2 * target_block_bytes and R >= min_steps * sublane:
        tr_cap = max(sublane, ((R // min_steps) // sublane) * sublane)
        tr = min(tr, tr_cap)

    return tr, tc


def identity_transform(
    x: jax.Array,
    *,
    target_block_bytes: int = 8 * 1024 * 1024,
    vmem_limit_bytes: int = 48 << 20,
    alias_input: bool = False,
    input_buffers: int = 2,
) -> jax.Array:
    """Pallas identity: returns an array equal to x (same shape, same dtype)."""
    orig_shape = x.shape
    dtype = x.dtype
    n = x.size
    if n == 0:
        return x

    R, C = _lane_dense_view(n)
    x2 = x.reshape(R, C)

    itemsize = jnp.dtype(dtype).itemsize
    tr, tc = _choose_tiles(R, C, itemsize, target_block_bytes)

    in_block_kwargs = {}
    if input_buffers != 2:
        in_block_kwargs["pipeline_mode"] = pl.Buffered(input_buffers)

    if tc == C:
        # 1-D grid over rows: the only meaningful axis.
        grid = (pl.cdiv(R, tr),)
        in_specs = [pl.BlockSpec((tr, C), lambda i: (i, 0), **in_block_kwargs)]
        out_specs = pl.BlockSpec((tr, C), lambda i: (i, 0))
        dim_sem = ("parallel",)
    else:
        grid = (pl.cdiv(R, tr), pl.cdiv(C, tc))
        in_specs = [pl.BlockSpec((tr, tc), lambda i, j: (i, j), **in_block_kwargs)]
        out_specs = pl.BlockSpec((tr, tc), lambda i, j: (i, j))
        dim_sem = ("parallel", "parallel")

    extra = {"input_output_aliases": {0: 0}} if alias_input else {}

    out2 = pl.pallas_call(
        _identity_kernel,
        out_shape=jax.ShapeDtypeStruct((R, C), dtype),
        grid_spec=pltpu.PrefetchScalarGridSpec(
            num_scalar_prefetch=0,
            grid=grid,
            in_specs=in_specs,
            out_specs=out_specs,
        ),
        compiler_params=pltpu.CompilerParams(
            dimension_semantics=dim_sem,
            vmem_limit_bytes=vmem_limit_bytes,
        ),
        cost_estimate=pl.CostEstimate(
            flops=0, transcendentals=0, bytes_accessed=2 * n * itemsize),
        **extra,
    )(x2)

    return out2.reshape(orig_shape)


if __name__ == "__main__":
    key = jax.random.PRNGKey(0)
    # Small NCHW-ish input consistent with a generic data transform module.
    x = jax.random.normal(key, (2, 4, 16, 16), dtype=jnp.float32)

    fn = jax.jit(identity_transform)
    y = jax.block_until_ready(fn(x))

    assert y.shape == x.shape and y.dtype == x.dtype
    assert bool(jnp.array_equal(y, x))
    print("KERNEL_OK")
</pallas_src>

<mosaic_0001>
module attributes {stable_mosaic.version = 11 : i64} {
  func.func @_identity_kernel(%arg0: i32, %arg1: memref<1x2048xf32, #tpu.memory_space<vmem>>, %arg2: memref<1x2048xf32, #tpu.memory_space<vmem>>) attributes {dimension_semantics = [#tpu.dimension_semantics<parallel>], iteration_bounds = array<i64: 1>, scalar_prefetch = 0 : i64, scratch_operands = 0 : i64, tpu.core_type = #tpu.core_type<tc>, window_params = [{transform_indices = @transform_0, window_bounds = array<i64: 1, 2048>}, {transform_indices = @transform_1, window_bounds = array<i64: 1, 2048>}]} {
    %c0 = arith.constant 0 : index
    %c0_0 = arith.constant 0 : index
    %0 = vector.load %arg1[%c0, %c0_0] : memref<1x2048xf32, #tpu.memory_space<vmem>>, vector<1x2048xf32>
    %c0_1 = arith.constant 0 : index
    %c0_2 = arith.constant 0 : index
    %1 = vector.load %arg2[%c0_1, %c0_2] : memref<1x2048xf32, #tpu.memory_space<vmem>>, vector<1x2048xf32>
    tpu.vector_store %arg2[%c0_1, %c0_2], %0 {strides = array<i32>} : memref<1x2048xf32, #tpu.memory_space<vmem>>, vector<1x2048xf32>,
    return
  }
  func.func @transform_0(%arg0: i32) -> (i32, i32) {
    %c0_i32 = arith.constant 0 : i32
    %c0_i32_0 = arith.constant 0 : i32
    return %arg0, %c0_i32 : i32, i32
  }
  func.func @transform_1(%arg0: i32) -> (i32, i32) {
    %c0_i32 = arith.constant 0 : i32
    %c0_i32_0 = arith.constant 0 : i32
    return %arg0, %c0_i32 : i32, i32
  }
}

</mosaic_0001>

<llo_original>
// kernel: identity_transform.1
$region0: #{identity_transform.1}
  #allocation0 [shape = 'u32[]', space=smem, size = 0x4, offset = 0x4, fixed_abs, tag = 'smem constant byte address 0x4 - core index']
  #allocation1 [shape = 'u32[144,128]{1,0:T(1,128)}', space=vmem, size = 0x12000, scoped, tag = 'internal scratch']
  %s0 = inlined_call_operand.vmem [shape: f32[1,2048], index: 0, kind: input, shape index: {}]
  %s1 = inlined_call_operand.vmem [shape: f32[1,2048], index: 1, kind: output, shape index: {}]
  %s2 = sld [smem:[#allocation0]]
  $region14: #{identity_transform.1} parent=0
    _
  %s4 = ssub.s32 1, %s2
  %s5 = scalar_select 0, %s4, %s2
  // Predicated region
  $region2: #{identity_transform.1} parent=0 // pred_check
    _
  $region3: #{identity_transform.1} parent=0 // pred_check_branch
    %7 = sbr.rel (0) target = $region5
  $region4: #{identity_transform.1} parent=0 // pred_region
    _
  $region5: #{identity_transform.1} parent=0 // pred_fallthru
    _
  %v8 = vld [vmem:[%s0] sm:$0xff]
  %v9 = vld [vmem:[%s0 + $0x8] sm:$0xff]
  %10 = vst [vmem:[%s1] sm:$0xff] %v8
  %11 = vst [vmem:[%s1 + $0x8] sm:$0xff] %v9
  // Predicated region
  $region6: #{identity_transform.1} parent=0 // pred_check
    _
  $region7: #{identity_transform.1} parent=0 // pred_check_branch
    %13 = sbr.rel (0) target = $region9
  $region8: #{identity_transform.1} parent=0 // pred_region
    _
  $region9: #{identity_transform.1} parent=0 // pred_fallthru
    _
  // Predicated region
  $region10: #{identity_transform.1} parent=0 // pred_check
    _
  $region11: #{identity_transform.1} parent=0 // pred_check_branch
    %15 = sbr.rel (0) target = $region13
  $region12: #{identity_transform.1} parent=0 // pred_region
    _
  $region13: #{identity_transform.1} parent=0 // pred_fallthru
    _

</llo_original>
